<compile_context>
chip_gen: v7x
topology: tpu7x:2x2x1
jax: 0.10.0
libtpu: 0.0.40
codegen_flags: <defaults>
</compile_context>

<pallas_src>
import functools

import jax
import jax.numpy as jnp
from jax.experimental import pallas as pl
from jax.experimental.pallas import tpu as pltpu

EPS = 1e-5


def _round_up(n, m):
    return ((n + m - 1) // m) * m


def _dc_kernel(x_ref, w1t_ref, gamma_ref, beta_ref, w2t_ref, b2_ref,
               out_ref, sum_ref, sq_ref, *scratch, batch, tb):
    hcache_ref = scratch[0] if scratch else None
    p = pl.program_id(0)   # 0: statistics pass, 1: normalize/output pass
    b = pl.program_id(1)   # batch-tile index

    def fc1():
        # fc1 WITHOUT bias (cancelled by the batch-mean subtraction).
        # x cast to bf16 per tile (VPU work hidden under the DMA); f32 acc.
        return jnp.dot(x_ref[...].astype(jnp.bfloat16), w1t_ref[...],
                       preferred_element_type=jnp.float32)

    @pl.when(p == 0)
    def _stats():
        h = fc1()

        @pl.when(b == 0)
        def _init():
            sum_ref[...] = jnp.zeros_like(sum_ref)
            sq_ref[...] = jnp.zeros_like(sq_ref)

        # Padding rows of x are zero and fc1 has no bias, so they contribute
        # exactly zero to sum / sumsq — no row mask needed.
        sum_ref[...] += jnp.sum(h, axis=0, keepdims=True)
        sq_ref[...] += jnp.sum(h * h, axis=0, keepdims=True)
        if hcache_ref is not None:
            start = pl.multiple_of(b * tb, tb)
            hcache_ref[pl.ds(start, tb), :] = h
        # No output write in pass 0: the out index_map pins pass-0 steps to
        # block 0, which pass 1 fully overwrites before it is written back.

    @pl.when(p == 1)
    def _normalize():
        @pl.when(b == 0)
        def _fold():
            inv_n = jnp.float32(1.0 / batch)
            mean = sum_ref[...] * inv_n
            var = jnp.maximum(sq_ref[...] * inv_n - mean * mean, 0.0)
            scale = gamma_ref[...] * jax.lax.rsqrt(var + EPS)   # [1, HP]
            shift = beta_ref[...] - mean * scale                # [1, HP]
            # Stats are dead from here on; reuse the scratch to broadcast the
            # folded per-column scale/shift to every remaining pass-1 tile.
            sum_ref[...] = scale
            sq_ref[...] = shift

        if hcache_ref is not None:
            start = pl.multiple_of(b * tb, tb)
            h = hcache_ref[pl.ds(start, tb), :]
        else:
            h = fc1()

        a = jnp.maximum(h * sum_ref[...] + sq_ref[...], 0.0)    # BN + ReLU
        logits = jnp.dot(a, w2t_ref[...],
                         preferred_element_type=jnp.float32) + b2_ref[...]
        m = jnp.max(logits, axis=1, keepdims=True)
        shifted = logits - m
        lse = jnp.log(jnp.sum(jnp.exp(shifted), axis=1, keepdims=True))
        out_ref[...] = shifted - lse


def domain_classifier(x, kparams, *, tb=2048,
                      vmem_cache_budget=20 * 1024 * 1024):
    """x: [B, feature_num] float32.  kparams: output of pack_params()."""
    B, F = x.shape
    HP = kparams["w1t"].shape[1]
    D = kparams["w2t"].shape[1]

    # Batch tile: multiple of 16 (sublane/bf16 packing); clamp to the batch.
    tb = min(tb, _round_up(B, 16))
    tb = _round_up(tb, 16)
    Bp = _round_up(B, tb)
    nb = Bp // tb

    # Zero-pad ragged batches only (f32; the bf16 cast happens inside the kernel).
    xp = x if Bp == B else jnp.pad(x, ((0, Bp - B), (0, 0)))

    # Single-stream path: cache h (f32) in VMEM when the whole batch fits.
    cache_bytes = Bp * HP * 4
    use_cache = cache_bytes <= vmem_cache_budget
    vmem_limit = 24 * 1024 * 1024 + (cache_bytes if use_cache else 0)

    if use_cache:
        x_index = lambda p, b: (b * (1 - p), 0)   # x DMA'd from HBM once
    else:
        x_index = lambda p, b: (b, 0)             # streamed twice

    scratch = [pltpu.VMEM((1, HP), jnp.float32),   # per-column sum, then scale
               pltpu.VMEM((1, HP), jnp.float32)]   # per-column sumsq, then shift
    if use_cache:
        scratch.append(pltpu.VMEM((Bp, HP), jnp.float32))

    kernel = functools.partial(_dc_kernel, batch=B, tb=tb)

    out = pl.pallas_call(
        kernel,
        out_shape=jax.ShapeDtypeStruct((Bp, D), jnp.float32),
        grid_spec=pltpu.PrefetchScalarGridSpec(
            num_scalar_prefetch=0,
            grid=(2, nb),   # (pass, batch tile)
            in_specs=[
                pl.BlockSpec((tb, F), x_index),               # x tile
                pl.BlockSpec((F, HP), lambda p, b: (0, 0)),   # w1t (resident)
                pl.BlockSpec((1, HP), lambda p, b: (0, 0)),   # gamma
                pl.BlockSpec((1, HP), lambda p, b: (0, 0)),   # beta
                pl.BlockSpec((HP, D), lambda p, b: (0, 0)),   # w2t
                pl.BlockSpec((1, D), lambda p, b: (0, 0)),    # b2
            ],
            # Collapse to block 0 during pass 0 so no pass-0 writebacks occur;
            # every block is fully written exactly once during pass 1.
            out_specs=pl.BlockSpec((tb, D), lambda p, b: (b * p, 0)),
            scratch_shapes=scratch,
        ),
        compiler_params=pltpu.CompilerParams(
            # Both axes "arbitrary": pass 1 consumes stats accumulated across
            # the whole batch in pass 0, and the collapsed out/x index maps and
            # persistent scratch all rely on strictly sequential grid order.
            dimension_semantics=("arbitrary", "arbitrary"),
            vmem_limit_bytes=int(vmem_limit),
        ),
    )(xp, kparams["w1t"], kparams["gamma"], kparams["beta"],
      kparams["w2t"], kparams["b2"])

    return out[:B]


def init_params(key, feature_num, domain_num, hidden=100):
    """PyTorch-faithful parameter shapes (as in nn.Module.__init__)."""
    k1, k2, k3, k4 = jax.random.split(key, 4)
    bound1 = 1.0 / jnp.sqrt(feature_num)
    w1 = jax.random.uniform(k1, (hidden, feature_num), jnp.float32, -bound1, bound1)
    b1 = jax.random.uniform(k2, (hidden,), jnp.float32, -bound1, bound1)
    gamma = jnp.ones((hidden,), jnp.float32)
    beta = jnp.zeros((hidden,), jnp.float32)
    bound2 = 1.0 / jnp.sqrt(hidden)
    w2 = jax.random.uniform(k3, (domain_num, hidden), jnp.float32, -bound2, bound2)
    b2 = jax.random.uniform(k4, (domain_num,), jnp.float32, -bound2, bound2)
    return {"w1": w1, "b1": b1, "gamma": gamma, "beta": beta, "w2": w2, "b2": b2}


def pack_params(params):
    """Kernel-ready params: transpose, pad hidden 100 -> 128, cast fc1 to bf16.

    fc1 bias is intentionally dropped: training-mode BatchNorm cancels it.
    Pad columns are exact zeros through BN/ReLU/fc2, so results are unchanged.
    """
    hidden, _ = params["w1"].shape
    domain_num = params["w2"].shape[0]
    hp = _round_up(hidden, 128)
    pad = hp - hidden
    w1t = jnp.pad(params["w1"].T, ((0, 0), (0, pad))).astype(jnp.bfloat16)
    gamma = jnp.pad(params["gamma"], (0, pad)).reshape(1, hp)
    beta = jnp.pad(params["beta"], (0, pad)).reshape(1, hp)
    w2t = jnp.pad(params["w2"].T, ((0, pad), (0, 0)))          # [hp, D] f32
    b2 = params["b2"].reshape(1, domain_num)
    return {"w1t": w1t, "gamma": gamma, "beta": beta, "w2t": w2t, "b2": b2}


def reference(x, params):
    """Pure-JAX reference mirroring the PyTorch module (training-mode BN).

    fc1 inputs are cast to bf16 (f32 accumulation) to match the kernel's MXU
    precision — an intentional deviation from PyTorch f32 fc1.  The fc1 bias IS
    applied here to show the kernel's bias-drop is semantics-preserving.
    """
    h = jnp.dot(x.astype(jnp.bfloat16), params["w1"].T.astype(jnp.bfloat16),
                preferred_element_type=jnp.float32) + params["b1"]
    mean = jnp.mean(h, axis=0, keepdims=True)
    var = jnp.mean((h - mean) ** 2, axis=0, keepdims=True)
    h = (h - mean) * jax.lax.rsqrt(var + EPS) * params["gamma"] + params["beta"]
    h = jnp.maximum(h, 0.0)
    logits = h @ params["w2"].T + params["b2"]
    return jax.nn.log_softmax(logits, axis=1)


if __name__ == "__main__":
    feature_num, domain_num, hidden = 32, 4, 100

    key = jax.random.PRNGKey(0)
    kx, kx2, kp = jax.random.split(key, 3)
    params = init_params(kp, feature_num, domain_num, hidden)
    kparams = pack_params(params)

    # Case 1: batch divisible by tile (32 rows, tb=16 -> 2 tiles), h-cache path.
    x = jax.random.normal(kx, (32, feature_num), jnp.float32)
    out = jax.block_until_ready(domain_classifier(x, kparams, tb=16))
    ref = reference(x, params)
    assert out.shape == (32, domain_num)
    assert jnp.allclose(out, ref, atol=2e-4, rtol=2e-4), "mismatch vs reference (B=32, cached)"

    # Case 2: ragged batch (28 rows) — zero-padded rows must not perturb BN stats.
    x2 = jax.random.normal(kx2, (28, feature_num), jnp.float32)
    out2 = jax.block_until_ready(domain_classifier(x2, kparams, tb=16))
    ref2 = reference(x2, params)
    assert out2.shape == (28, domain_num)
    assert jnp.allclose(out2, ref2, atol=2e-4, rtol=2e-4), "mismatch vs reference (B=28, cached)"

    # Case 3: same ragged batch, h cache disabled -> two-stream fallback path.
    out3 = jax.block_until_ready(
        domain_classifier(x2, kparams, tb=16, vmem_cache_budget=0))
    assert out3.shape == (28, domain_num)
    assert jnp.allclose(out3, ref2, atol=2e-4, rtol=2e-4), "mismatch vs reference (B=28, streamed)"

    print("KERNEL_OK")
</pallas_src>

<mosaic_0001>
module attributes {stable_mosaic.version = 11 : i64} {
  func.func @_dc_kernel(%arg0: i32, %arg1: i32, %arg2: memref<16x32xf32, #tpu.memory_space<vmem>>, %arg3: memref<32x128xbf16, #tpu.memory_space<vmem>>, %arg4: memref<1x128xf32, #tpu.memory_space<vmem>>, %arg5: memref<1x128xf32, #tpu.memory_space<vmem>>, %arg6: memref<128x4xf32, #tpu.memory_space<vmem>>, %arg7: memref<1x4xf32, #tpu.memory_space<vmem>>, %arg8: memref<16x4xf32, #tpu.memory_space<vmem>>, %arg9: memref<1x128xf32, #tpu.memory_space<vmem>>, %arg10: memref<1x128xf32, #tpu.memory_space<vmem>>, %arg11: memref<32x128xf32, #tpu.memory_space<vmem>>) attributes {dimension_semantics = [#tpu.dimension_semantics<arbitrary>, #tpu.dimension_semantics<arbitrary>], iteration_bounds = array<i64: 2, 2>, scalar_prefetch = 0 : i64, scratch_operands = 3 : i64, tpu.core_type = #tpu.core_type<tc>, window_params = [{transform_indices = @transform_0, window_bounds = array<i64: 16, 32>}, {pipeline_mode = #tpu.pipeline_mode<synchronous>, transform_indices = @transform_1, window_bounds = array<i64: 32, 128>}, {pipeline_mode = #tpu.pipeline_mode<synchronous>, transform_indices = @transform_2, window_bounds = array<i64: 1, 128>}, {pipeline_mode = #tpu.pipeline_mode<synchronous>, transform_indices = @transform_3, window_bounds = array<i64: 1, 128>}, {pipeline_mode = #tpu.pipeline_mode<synchronous>, transform_indices = @transform_4, window_bounds = array<i64: 128, 4>}, {pipeline_mode = #tpu.pipeline_mode<synchronous>, transform_indices = @transform_5, window_bounds = array<i64: 1, 4>}, {transform_indices = @transform_6, window_bounds = array<i64: 16, 4>}]} {
    %c0_i32 = arith.constant 0 : i32
    %0 = arith.cmpi eq, %arg0, %c0_i32 : i32
    %1 = arith.extui %0 : i1 to i32
    %c0_i32_0 = arith.constant 0 : i32
    %2 = arith.cmpi ne, %1, %c0_i32_0 : i32
    scf.if %2 {
      %c0 = arith.constant 0 : index
      %c0_2 = arith.constant 0 : index
      %6 = vector.load %arg2[%c0, %c0_2] : memref<16x32xf32, #tpu.memory_space<vmem>>, vector<16x32xf32>
      %7 = arith.truncf %6 : vector<16x32xf32> to vector<16x32xbf16>
      %c0_3 = arith.constant 0 : index
      %c0_4 = arith.constant 0 : index
      %8 = vector.load %arg3[%c0_3, %c0_4] : memref<32x128xbf16, #tpu.memory_space<vmem>>, vector<32x128xbf16>
      %cst = arith.constant dense<0.000000e+00> : vector<16x128xf32>
      %9 = tpu.matmul %7, %8, %cst {dimension_numbers = #tpu.dot_dimension_numbers<[1], [0], [0], [1], [0, 0, 1, 1], [], []>} : vector<16x32xbf16>, vector<32x128xbf16>, vector<16x128xf32> -> vector<16x128xf32>
      %c0_i32_5 = arith.constant 0 : i32
      %10 = arith.cmpi eq, %arg1, %c0_i32_5 : i32
      %11 = arith.extui %10 : i1 to i32
      %c0_i32_6 = arith.constant 0 : i32
      %12 = arith.cmpi ne, %11, %c0_i32_6 : i32
      scf.if %12 {
        %cst_18 = arith.constant 0.000000e+00 : f32
        %28 = vector.broadcast %cst_18 : f32 to vector<1x128xf32>
        %c0_19 = arith.constant 0 : index
        %c0_20 = arith.constant 0 : index
        %29 = vector.load %arg9[%c0_19, %c0_20] : memref<1x128xf32, #tpu.memory_space<vmem>>, vector<1x128xf32>
        tpu.vector_store %arg9[%c0_19, %c0_20], %28 {strides = array<i32>} : memref<1x128xf32, #tpu.memory_space<vmem>>, vector<1x128xf32>,
        %cst_21 = arith.constant 0.000000e+00 : f32
        %30 = vector.broadcast %cst_21 : f32 to vector<1x128xf32>
        %c0_22 = arith.constant 0 : index
        %c0_23 = arith.constant 0 : index
        %31 = vector.load %arg10[%c0_22, %c0_23] : memref<1x128xf32, #tpu.memory_space<vmem>>, vector<1x128xf32>
        tpu.vector_store %arg10[%c0_22, %c0_23], %30 {strides = array<i32>} : memref<1x128xf32, #tpu.memory_space<vmem>>, vector<1x128xf32>,
      } else {
      }
      %c0_7 = arith.constant 0 : index
      %c0_8 = arith.constant 0 : index
      %13 = vector.load %arg9[%c0_7, %c0_8] : memref<1x128xf32, #tpu.memory_space<vmem>>, vector<1x128xf32>
      %cst_9 = arith.constant dense<0.000000e+00> : vector<128xf32>
      %14 = vector.multi_reduction <add>, %9, %cst_9 [0] : vector<16x128xf32> to vector<128xf32>
      %15 = vector.shape_cast %14 : vector<128xf32> to vector<1x128xf32>
      %16 = arith.addf %13, %15 : vector<1x128xf32>
      %c0_10 = arith.constant 0 : index
      %c0_11 = arith.constant 0 : index
      %17 = vector.load %arg9[%c0_10, %c0_11] : memref<1x128xf32, #tpu.memory_space<vmem>>, vector<1x128xf32>
      tpu.vector_store %arg9[%c0_10, %c0_11], %16 {strides = array<i32>} : memref<1x128xf32, #tpu.memory_space<vmem>>, vector<1x128xf32>,
      %c0_12 = arith.constant 0 : index
      %c0_13 = arith.constant 0 : index
      %18 = vector.load %arg10[%c0_12, %c0_13] : memref<1x128xf32, #tpu.memory_space<vmem>>, vector<1x128xf32>
      %19 = arith.mulf %9, %9 : vector<16x128xf32>
      %cst_14 = arith.constant dense<0.000000e+00> : vector<128xf32>
      %20 = vector.multi_reduction <add>, %19, %cst_14 [0] : vector<16x128xf32> to vector<128xf32>
      %21 = vector.shape_cast %20 : vector<128xf32> to vector<1x128xf32>
      %22 = arith.addf %18, %21 : vector<1x128xf32>
      %c0_15 = arith.constant 0 : index
      %c0_16 = arith.constant 0 : index
      %23 = vector.load %arg10[%c0_15, %c0_16] : memref<1x128xf32, #tpu.memory_space<vmem>>, vector<1x128xf32>
      tpu.vector_store %arg10[%c0_15, %c0_16], %22 {strides = array<i32>} : memref<1x128xf32, #tpu.memory_space<vmem>>, vector<1x128xf32>,
      %c16_i32 = arith.constant 16 : i32
      %24 = arith.muli %arg1, %c16_i32 : i32
      %25 = tpu.assume_multiple %24, 16 : i32
      %26 = arith.index_cast %25 : i32 to index
      %c0_17 = arith.constant 0 : index
      %27 = vector.load %arg11[%26, %c0_17] : memref<32x128xf32, #tpu.memory_space<vmem>>, vector<16x128xf32>
      tpu.vector_store %arg11[%26, %c0_17], %9 {strides = array<i32>} : memref<32x128xf32, #tpu.memory_space<vmem>>, vector<16x128xf32>,
    } else {
    }
    %c1_i32 = arith.constant 1 : i32
    %3 = arith.cmpi eq, %arg0, %c1_i32 : i32
    %4 = arith.extui %3 : i1 to i32
    %c0_i32_1 = arith.constant 0 : i32
    %5 = arith.cmpi ne, %4, %c0_i32_1 : i32
    scf.if %5 {
      %c0_i32_2 = arith.constant 0 : i32
      %6 = arith.cmpi eq, %arg1, %c0_i32_2 : i32
      %7 = arith.extui %6 : i1 to i32
      %c0_i32_3 = arith.constant 0 : i32
      %8 = arith.cmpi ne, %7, %c0_i32_3 : i32
      scf.if %8 {
        %c0_17 = arith.constant 0 : index
        %c0_18 = arith.constant 0 : index
        %37 = vector.load %arg9[%c0_17, %c0_18] : memref<1x128xf32, #tpu.memory_space<vmem>>, vector<1x128xf32>
        %cst_19 = arith.constant 3.125000e-02 : f32
        %38 = vector.broadcast %cst_19 : f32 to vector<1x128xf32>
        %39 = arith.mulf %37, %38 : vector<1x128xf32>
        %c0_20 = arith.constant 0 : index
        %c0_21 = arith.constant 0 : index
        %40 = vector.load %arg10[%c0_20, %c0_21] : memref<1x128xf32, #tpu.memory_space<vmem>>, vector<1x128xf32>
        %cst_22 = arith.constant 3.125000e-02 : f32
        %41 = vector.broadcast %cst_22 : f32 to vector<1x128xf32>
        %42 = arith.mulf %40, %41 : vector<1x128xf32>
        %43 = arith.mulf %39, %39 : vector<1x128xf32>
        %44 = arith.subf %42, %43 : vector<1x128xf32>
        %cst_23 = arith.constant 0.000000e+00 : f32
        %45 = vector.broadcast %cst_23 : f32 to vector<1x128xf32>
        %46 = arith.maximumf %44, %45 : vector<1x128xf32>
        %c0_24 = arith.constant 0 : index
        %c0_25 = arith.constant 0 : index
        %47 = vector.load %arg4[%c0_24, %c0_25] : memref<1x128xf32, #tpu.memory_space<vmem>>, vector<1x128xf32>
        %cst_26 = arith.constant 9.99999974E-6 : f32
        %48 = vector.broadcast %cst_26 : f32 to vector<1x128xf32>
        %49 = arith.addf %46, %48 : vector<1x128xf32>
        %50 = math.rsqrt %49 : vector<1x128xf32>
        %51 = arith.mulf %47, %50 : vector<1x128xf32>
        %c0_27 = arith.constant 0 : index
        %c0_28 = arith.constant 0 : index
        %52 = vector.load %arg5[%c0_27, %c0_28] : memref<1x128xf32, #tpu.memory_space<vmem>>, vector<1x128xf32>
        %53 = arith.mulf %39, %51 : vector<1x128xf32>
        %54 = arith.subf %52, %53 : vector<1x128xf32>
        %c0_29 = arith.constant 0 : index
        %c0_30 = arith.constant 0 : index
        %55 = vector.load %arg9[%c0_29, %c0_30] : memref<1x128xf32, #tpu.memory_space<vmem>>, vector<1x128xf32>
        tpu.vector_store %arg9[%c0_29, %c0_30], %51 {strides = array<i32>} : memref<1x128xf32, #tpu.memory_space<vmem>>, vector<1x128xf32>,
        %c0_31 = arith.constant 0 : index
        %c0_32 = arith.constant 0 : index
        %56 = vector.load %arg10[%c0_31, %c0_32] : memref<1x128xf32, #tpu.memory_space<vmem>>, vector<1x128xf32>
        tpu.vector_store %arg10[%c0_31, %c0_32], %54 {strides = array<i32>} : memref<1x128xf32, #tpu.memory_space<vmem>>, vector<1x128xf32>,
      } else {
      }
      %c16_i32 = arith.constant 16 : i32
      %9 = arith.muli %arg1, %c16_i32 : i32
      %10 = tpu.assume_multiple %9, 16 : i32
      %11 = arith.index_cast %10 : i32 to index
      %c0 = arith.constant 0 : index
      %12 = vector.load %arg11[%11, %c0] : memref<32x128xf32, #tpu.memory_space<vmem>>, vector<16x128xf32>
      %c0_4 = arith.constant 0 : index
      %c0_5 = arith.constant 0 : index
      %13 = vector.load %arg9[%c0_4, %c0_5] : memref<1x128xf32, #tpu.memory_space<vmem>>, vector<1x128xf32>
      %14 = vector.broadcast %13 : vector<1x128xf32> to vector<16x128xf32>
      %15 = arith.mulf %12, %14 : vector<16x128xf32>
      %c0_6 = arith.constant 0 : index
      %c0_7 = arith.constant 0 : index
      %16 = vector.load %arg10[%c0_6, %c0_7] : memref<1x128xf32, #tpu.memory_space<vmem>>, vector<1x128xf32>
      %17 = vector.broadcast %16 : vector<1x128xf32> to vector<16x128xf32>
      %18 = arith.addf %15, %17 : vector<16x128xf32>
      %cst = arith.constant 0.000000e+00 : f32
      %19 = vector.broadcast %cst : f32 to vector<16x128xf32>
      %20 = arith.maximumf %18, %19 : vector<16x128xf32>
      %c0_8 = arith.constant 0 : index
      %c0_9 = arith.constant 0 : index
      %21 = vector.load %arg6[%c0_8, %c0_9] : memref<128x4xf32, #tpu.memory_space<vmem>>, vector<128x4xf32>
      %cst_10 = arith.constant dense<0.000000e+00> : vector<16x4xf32>
      %22 = tpu.matmul %20, %21, %cst_10 {dimension_numbers = #tpu.dot_dimension_numbers<[1], [0], [0], [1], [0, 0, 1, 1], [], []>} : vector<16x128xf32>, vector<128x4xf32>, vector<16x4xf32> -> vector<16x4xf32>
      %c0_11 = arith.constant 0 : index
      %c0_12 = arith.constant 0 : index
      %23 = vector.load %arg7[%c0_11, %c0_12] : memref<1x4xf32, #tpu.memory_space<vmem>>, vector<1x4xf32>
      %24 = vector.broadcast %23 : vector<1x4xf32> to vector<16x4xf32>
      %25 = arith.addf %22, %24 : vector<16x4xf32>
      %cst_13 = arith.constant dense<0xFF800000> : vector<16xf32>
      %26 = vector.multi_reduction <maximumf>, %25, %cst_13 [1] : vector<16x4xf32> to vector<16xf32>
      %27 = vector.shape_cast %26 : vector<16xf32> to vector<16x1xf32>
      %28 = vector.broadcast %27 : vector<16x1xf32> to vector<16x4xf32>
      %29 = arith.subf %25, %28 : vector<16x4xf32>
      %30 = math.exp %29 : vector<16x4xf32>
      %cst_14 = arith.constant dense<0.000000e+00> : vector<16xf32>
      %31 = vector.multi_reduction <add>, %30, %cst_14 [1] : vector<16x4xf32> to vector<16xf32>
      %32 = vector.shape_cast %31 : vector<16xf32> to vector<16x1xf32>
      %33 = math.log %32 : vector<16x1xf32>
      %34 = vector.broadcast %33 : vector<16x1xf32> to vector<16x4xf32>
      %35 = arith.subf %29, %34 : vector<16x4xf32>
      %c0_15 = arith.constant 0 : index
      %c0_16 = arith.constant 0 : index
      %36 = vector.load %arg8[%c0_15, %c0_16] : memref<16x4xf32, #tpu.memory_space<vmem>>, vector<16x4xf32>
      tpu.vector_store %arg8[%c0_15, %c0_16], %35 {strides = array<i32>} : memref<16x4xf32, #tpu.memory_space<vmem>>, vector<16x4xf32>,
    } else {
    }
    return
  }
  func.func @transform_0(%arg0: i32, %arg1: i32) -> (i32, i32) {
    %c1_i32 = arith.constant 1 : i32
    %0 = arith.subi %c1_i32, %arg0 : i32
    %1 = arith.muli %arg1, %0 : i32
    %c0_i32 = arith.constant 0 : i32
    %c0_i32_0 = arith.constant 0 : i32
    return %1, %c0_i32 : i32, i32
  }
  func.func @transform_1(%arg0: i32, %arg1: i32) -> (i32, i32) {
    %c0_i32 = arith.constant 0 : i32
    %c0_i32_0 = arith.constant 0 : i32
    %c0_i32_1 = arith.constant 0 : i32
    return %c0_i32, %c0_i32_0 : i32, i32
  }
  func.func @transform_2(%arg0: i32, %arg1: i32) -> (i32, i32) {
    %c0_i32 = arith.constant 0 : i32
    %c0_i32_0 = arith.constant 0 : i32
    %c0_i32_1 = arith.constant 0 : i32
    return %c0_i32, %c0_i32_0 : i32, i32
  }
  func.func @transform_3(%arg0: i32, %arg1: i32) -> (i32, i32) {
    %c0_i32 = arith.constant 0 : i32
    %c0_i32_0 = arith.constant 0 : i32
    %c0_i32_1 = arith.constant 0 : i32
    return %c0_i32, %c0_i32_0 : i32, i32
  }
  func.func @transform_4(%arg0: i32, %arg1: i32) -> (i32, i32) {
    %c0_i32 = arith.constant 0 : i32
    %c0_i32_0 = arith.constant 0 : i32
    %c0_i32_1 = arith.constant 0 : i32
    return %c0_i32, %c0_i32_0 : i32, i32
  }
  func.func @transform_5(%arg0: i32, %arg1: i32) -> (i32, i32) {
    %c0_i32 = arith.constant 0 : i32
    %c0_i32_0 = arith.constant 0 : i32
    %c0_i32_1 = arith.constant 0 : i32
    return %c0_i32, %c0_i32_0 : i32, i32
  }
  func.func @transform_6(%arg0: i32, %arg1: i32) -> (i32, i32) {
    %0 = arith.muli %arg1, %arg0 : i32
    %c0_i32 = arith.constant 0 : i32
    %c0_i32_0 = arith.constant 0 : i32
    return %0, %c0_i32 : i32, i32
  }
}

</mosaic_0001>

<llo_original>
// kernel: tpu_custom_call.1
$region0: #{tpu_custom_call.1}
  #allocation0 [shape = 'u32[]', space=smem, size = 0x4, offset = 0x4, fixed_abs, tag = 'smem constant byte address 0x4 - core index']
  #allocation1 [shape = 'u32[144,128]{1,0:T(1,128)}', space=vmem, size = 0x12000, scoped, tag = 'internal scratch']
  #allocation2 [shape = 'f32[1,128]{1,0:T(1,128)}', space=vmem, size = 0x200, scoped, tag = 'scratch operand']
  #allocation3 [shape = 'f32[1,128]{1,0:T(1,128)}', space=vmem, size = 0x200, scoped, tag = 'scratch operand']
  #allocation4 [shape = 'f32[32,128]{1,0:T(8,128)}', space=vmem, size = 0x4000, scoped, tag = 'scratch operand']
  %s0 = inlined_call_operand.vmem [shape: f32[32,32], index: 0, kind: input, shape index: {}]
  %s1 = inlined_call_operand.vmem [shape: bf16[32,128], index: 1, kind: input, shape index: {}]
  %s2 = inlined_call_operand.vmem [shape: f32[1,128], index: 2, kind: input, shape index: {}]
  %s3 = inlined_call_operand.vmem [shape: f32[1,128], index: 3, kind: input, shape index: {}]
  %s4 = inlined_call_operand.vmem [shape: f32[128,4], index: 4, kind: input, shape index: {}]
  %s5 = inlined_call_operand.vmem [shape: f32[1,4], index: 5, kind: input, shape index: {}]
  %s6 = inlined_call_operand.vmem [shape: f32[32,4], index: 6, kind: output, shape index: {}]
  %s7 = sld [smem:[#allocation0]]
  $region73: #{tpu_custom_call.1} parent=0
    _
  %s9 = ssub.s32 1, %s7
  %s10 = scalar_select 0, %s9, %s7
  loop: start=0, step=1, limit=6
  $region2: #{tpu_custom_call.1} parent=0 // loop_pre_header
    _
  $region3: #{tpu_custom_call.1} parent=0 // loop_header
    %s12 = sphi 0, %s16
    %p13 = scmp.ge.s32.totalorder %s12, 6
    %s19 = sphi 0, %s31
    %s20 = sphi 0, %s27
    %s21 = sphi 0, %s19
    %s22 = sphi 0, %s20
    %s23 = sphi 0, %s21
    %s24 = sphi 0, %s22
    %s38 = sphi 0, %s40
    %s41 = sphi 0, %s38
    %s42 = sphi 0, %s41
    %s58 = sphi 0, %s42
    %s62 = sphi 0, %s62
    %s64 = sphi 0, %s62
    %s65 = sphi 0, %s64
    %s79 = sphi 0, %s65
    %s83 = sphi 0, %s83
    %s85 = sphi 0, %s83
    %s86 = sphi 0, %s85
    %s100 = sphi 0, %s86
    %s104 = sphi 0, %s104
    %s106 = sphi 0, %s104
    %s107 = sphi 0, %s106
    %s121 = sphi 0, %s107
    %s125 = sphi 0, %s125
    %s127 = sphi 0, %s125
    %s128 = sphi 0, %s127
    %s142 = sphi 0, %s128
    %s146 = sphi 0, %s146
    %s148 = sphi 0, %s146
    %s149 = sphi 0, %s148
    %s163 = sphi 0, %s149
    %s171 = sphi 0, %s173
    %s174 = sphi 0, %s171
    %s175 = sphi 0, %s174
    %s191 = sphi 0, %s175
  $region4: #{tpu_custom_call.1} parent=0 // loop_header_branch
    %15 = sbr.rel (%p13) target = $region8
  $region5: #{tpu_custom_call.1} parent=0 // loop_body
    %s17 = ssub.s32 %s12, 1
    %s18 = ssub.s32 %s12, 2
    %s25 = sadd.s32 1, %s20
    %p26 = scmp.ge.s32.totalorder %s25, 2
    %s27 = scalar_select %p26, 0, %s25
    %s28 = sadd.s32 1, %s19
    %s29 = scalar_select %p26, %s28, %s19
    %p30 = scmp.ge.s32.totalorder %s29, 2
    %s31 = scalar_select %p30, 0, %s29
    %s32 = ssub.s32 1, %s19
    %s33 = smul.u32 %s20, %s32
    %s34 = ssub.s32 1, %s31
    %s35 = smul.u32 %s27, %s34
    %s36 = ssub.s32 %s33, %s35
    %p37 = scmp.eq.s32.totalorder %s36, 0
    %s39 = sadd.s32 %s38, 1
    %s40 = scalar_select %p37, %s38, %s39
    %p43 = pneg %p37
    %p44 = scmp.eq.s32.totalorder %s12, 3
    %p45 = por %p43, %p44
    %p46 = scmp.ne.s32.totalorder %s38, %s41
    %p47 = scmp.eq.s32.totalorder %s12, 0
    %p48 = por %p46, %p47
    %p49 = scmp.ne.s32.totalorder %s38, %s41
    %p50 = scmp.eq.s32.totalorder %s17, 3
    %p51 = por %p49, %p50
    %p52 = scmp.ne.s32.totalorder %s41, %s42
    %p53 = scmp.eq.s32.totalorder %s17, 0
    %p54 = por %p52, %p53
    %p55 = scmp.ne.s32.totalorder %s41, %s42
    %p56 = scmp.eq.s32.totalorder %s18, 3
    %p57 = por %p55, %p56
    %p59 = scmp.ne.s32.totalorder %s42, %s58
    %p60 = scmp.eq.s32.totalorder %s18, 0
    %p61 = por %p59, %p60
    %s63 = sadd.s32 %s62, 1
    %p66 = scmp.eq.s32.totalorder %s12, 3
    %p67 = scmp.ne.s32.totalorder %s62, %s64
    %p68 = scmp.eq.s32.totalorder %s12, 0
    %p69 = por %p67, %p68
    %p70 = scmp.ne.s32.totalorder %s62, %s64
    %p71 = scmp.eq.s32.totalorder %s17, 3
    %p72 = por %p70, %p71
    %p73 = scmp.ne.s32.totalorder %s64, %s65
    %p74 = scmp.eq.s32.totalorder %s17, 0
    %p75 = por %p73, %p74
    %p76 = scmp.ne.s32.totalorder %s64, %s65
    %p77 = scmp.eq.s32.totalorder %s18, 3
    %p78 = por %p76, %p77
    %p80 = scmp.ne.s32.totalorder %s65, %s79
    %p81 = scmp.eq.s32.totalorder %s18, 0
    %p82 = por %p80, %p81
    %s84 = sadd.s32 %s83, 1
    %p87 = scmp.eq.s32.totalorder %s12, 3
    %p88 = scmp.ne.s32.totalorder %s83, %s85
    %p89 = scmp.eq.s32.totalorder %s12, 0
    %p90 = por %p88, %p89
    %p91 = scmp.ne.s32.totalorder %s83, %s85
    %p92 = scmp.eq.s32.totalorder %s17, 3
    %p93 = por %p91, %p92
    %p94 = scmp.ne.s32.totalorder %s85, %s86
    %p95 = scmp.eq.s32.totalorder %s17, 0
    %p96 = por %p94, %p95
    %p97 = scmp.ne.s32.totalorder %s85, %s86
    %p98 = scmp.eq.s32.totalorder %s18, 3
    %p99 = por %p97, %p98
    %p101 = scmp.ne.s32.totalorder %s86, %s100
    %p102 = scmp.eq.s32.totalorder %s18, 0
    %p103 = por %p101, %p102
    %s105 = sadd.s32 %s104, 1
    %p108 = scmp.eq.s32.totalorder %s12, 3
    %p109 = scmp.ne.s32.totalorder %s104, %s106
    %p110 = scmp.eq.s32.totalorder %s12, 0
    %p111 = por %p109, %p110
    %p112 = scmp.ne.s32.totalorder %s104, %s106
    %p113 = scmp.eq.s32.totalorder %s17, 3
    %p114 = por %p112, %p113
    %p115 = scmp.ne.s32.totalorder %s106, %s107
    %p116 = scmp.eq.s32.totalorder %s17, 0
    %p117 = por %p115, %p116
    %p118 = scmp.ne.s32.totalorder %s106, %s107
    %p119 = scmp.eq.s32.totalorder %s18, 3
    %p120 = por %p118, %p119
    %p122 = scmp.ne.s32.totalorder %s107, %s121
    %p123 = scmp.eq.s32.totalorder %s18, 0
    %p124 = por %p122, %p123
    %s126 = sadd.s32 %s125, 1
    %p129 = scmp.eq.s32.totalorder %s12, 3
    %p130 = scmp.ne.s32.totalorder %s125, %s127
    %p131 = scmp.eq.s32.totalorder %s12, 0
    %p132 = por %p130, %p131
    %p133 = scmp.ne.s32.totalorder %s125, %s127
    %p134 = scmp.eq.s32.totalorder %s17, 3
    %p135 = por %p133, %p134
    %p136 = scmp.ne.s32.totalorder %s127, %s128
    %p137 = scmp.eq.s32.totalorder %s17, 0
    %p138 = por %p136, %p137
    %p139 = scmp.ne.s32.totalorder %s127, %s128
    %p140 = scmp.eq.s32.totalorder %s18, 3
    %p141 = por %p139, %p140
    %p143 = scmp.ne.s32.totalorder %s128, %s142
    %p144 = scmp.eq.s32.totalorder %s18, 0
    %p145 = por %p143, %p144
    %s147 = sadd.s32 %s146, 1
    %p150 = scmp.eq.s32.totalorder %s12, 3
    %p151 = scmp.ne.s32.totalorder %s146, %s148
    %p152 = scmp.eq.s32.totalorder %s12, 0
    %p153 = por %p151, %p152
    %p154 = scmp.ne.s32.totalorder %s146, %s148
    %p155 = scmp.eq.s32.totalorder %s17, 3
    %p156 = por %p154, %p155
    %p157 = scmp.ne.s32.totalorder %s148, %s149
    %p158 = scmp.eq.s32.totalorder %s17, 0
    %p159 = por %p157, %p158
    %p160 = scmp.ne.s32.totalorder %s148, %s149
    %p161 = scmp.eq.s32.totalorder %s18, 3
    %p162 = por %p160, %p161
    %p164 = scmp.ne.s32.totalorder %s149, %s163
    %p165 = scmp.eq.s32.totalorder %s18, 0
    %p166 = por %p164, %p165
    %s167 = smul.u32 %s20, %s19
    %s168 = smul.u32 %s27, %s31
    %s169 = ssub.s32 %s167, %s168
    %p170 = scmp.eq.s32.totalorder %s169, 0
    %s172 = sadd.s32 %s171, 1
    %s173 = scalar_select %p170, %s171, %s172
    %p176 = pneg %p170
    %p177 = scmp.eq.s32.totalorder %s12, 3
    %p178 = por %p176, %p177
    %p179 = scmp.ne.s32.totalorder %s171, %s174
    %p180 = scmp.eq.s32.totalorder %s12, 0
    %p181 = por %p179, %p180
    %p182 = scmp.ne.s32.totalorder %s171, %s174
    %p183 = scmp.eq.s32.totalorder %s17, 3
    %p184 = por %p182, %p183
    %p185 = scmp.ne.s32.totalorder %s174, %s175
    %p186 = scmp.eq.s32.totalorder %s17, 0
    %p187 = por %p185, %p186
    %p188 = scmp.ne.s32.totalorder %s174, %s175
    %p189 = scmp.eq.s32.totalorder %s18, 3
    %p190 = por %p188, %p189
    %p192 = scmp.ne.s32.totalorder %s175, %s191
    %p193 = scmp.eq.s32.totalorder %s18, 0
    %p194 = por %p192, %p193
    %p195 = scmp.le.s32.totalorder 1, %s12
    %p196 = scmp.lt.s32.totalorder %s12, 5
    %p197 = pnand %p195, %p196
    %p198 = pneg %p197
    // Predicated region
    $region9: #{tpu_custom_call.1} parent=5 // pred_check
      _
    $region10: #{tpu_custom_call.1} parent=5 // pred_check_branch
      %200 = sbr.rel (%p197) target = $region12
    $region11: #{tpu_custom_call.1} parent=5 // pred_region
      %s201 = ssub.s32 %s12, 1
      // Predicated region
      $region13: #{tpu_custom_call.1} parent=11 // pred_check
        %p202 = pneg %p75
      $region14: #{tpu_custom_call.1} parent=11 // pred_check_branch
        %204 = sbr.rel (%p202) target = $region16
      $region15: #{tpu_custom_call.1} parent=11 // pred_region
        _
      $region16: #{tpu_custom_call.1} parent=11 // pred_fallthru
        _
      // Predicated region
      $region17: #{tpu_custom_call.1} parent=11 // pred_check
        %p205 = pneg %p96
      $region18: #{tpu_custom_call.1} parent=11 // pred_check_branch
        %207 = sbr.rel (%p205) target = $region20
      $region19: #{tpu_custom_call.1} parent=11 // pred_region
        _
      $region20: #{tpu_custom_call.1} parent=11 // pred_fallthru
        _
      // Predicated region
      $region21: #{tpu_custom_call.1} parent=11 // pred_check
        %p208 = pneg %p117
      $region22: #{tpu_custom_call.1} parent=11 // pred_check_branch
        %210 = sbr.rel (%p208) target = $region24
      $region23: #{tpu_custom_call.1} parent=11 // pred_region
        _
      $region24: #{tpu_custom_call.1} parent=11 // pred_fallthru
        _
      // Predicated region
      $region25: #{tpu_custom_call.1} parent=11 // pred_check
        %p211 = pneg %p138
      $region26: #{tpu_custom_call.1} parent=11 // pred_check_branch
        %213 = sbr.rel (%p211) target = $region28
      $region27: #{tpu_custom_call.1} parent=11 // pred_region
        _
      $region28: #{tpu_custom_call.1} parent=11 // pred_fallthru
        _
      // Predicated region
      $region29: #{tpu_custom_call.1} parent=11 // pred_check
        %p214 = pneg %p159
      $region30: #{tpu_custom_call.1} parent=11 // pred_check_branch
        %216 = sbr.rel (%p214) target = $region32
      $region31: #{tpu_custom_call.1} parent=11 // pred_region
        _
      $region32: #{tpu_custom_call.1} parent=11 // pred_fallthru
        _
    $region12: #{tpu_custom_call.1} parent=5 // pred_fallthru
      _
    %p217 = scmp.lt.s32.totalorder %s12, 4
    // Predicated region
    $region33: #{tpu_custom_call.1} parent=5 // pred_check
      %p218 = pneg %p217
    $region34: #{tpu_custom_call.1} parent=5 // pred_check_branch
      %220 = sbr.rel (%p218) target = $region36
    $region35: #{tpu_custom_call.1} parent=5 // pred_region
      // Predicated region
      $region37: #{tpu_custom_call.1} parent=35 // pred_check
        %p221 = pneg %p48
      $region38: #{tpu_custom_call.1} parent=35 // pred_check_branch
        %223 = sbr.rel (%p221) target = $region40
      $region39: #{tpu_custom_call.1} parent=35 // pred_region
        %s224 = ssub.s32 1, %s19
        %s225 = smul.u32 %s20, %s224
        %s226 = smul.u32 2, %s225
        %p227 = scmp.lt.s32.totalorder %s226, 3
        %s228 = scalar_select %p227, %s226, 3
        %s229 = smul.addr %s228, 8
        %s230 = scalar_lea.vmem %s0, %s229
        %s231 = ssub.s32 1, %s19
        %s232 = smul.u32 %s20, %s231
        %s233 = smul.u32 2, %s232
      $region40: #{tpu_custom_call.1} parent=35 // pred_fallthru
        _
    $region36: #{tpu_custom_call.1} parent=5 // pred_fallthru
      _
    %p234 = scmp.le.s32.totalorder 1, %s12
    %p235 = scmp.lt.s32.totalorder %s12, 5
    %p236 = pnand %p234, %p235
    %p237 = pneg %p236
    // Predicated region
    $region41: #{tpu_custom_call.1} parent=5 // pred_check
      _
    $region42: #{tpu_custom_call.1} parent=5 // pred_check_branch
      %239 = sbr.rel (%p236) target = $region44
    $region43: #{tpu_custom_call.1} parent=5 // pred_region
      %s240 = ssub.s32 %s12, 1
      %s241 = ssub.s32 1, %s21
      %s242 = smul.u32 %s22, %s241
      %s243 = smul.u32 2, %s242
      %p244 = scmp.lt.s32.totalorder %s243, 3
      %s245 = scalar_select %p244, %s243, 3
      %s246 = smul.addr %s245, 8
      %s247 = scalar_lea.vmem %s0, %s246
      %p248 = pneg %p54
      %p249 = pneg %p51
      %p250 = pneg %p75
      %p251 = pneg %p72
      %p252 = pneg %p96
      %p253 = pneg %p93
      %p254 = pneg %p117
      %p255 = pneg %p114
      %p256 = pneg %p138
      %p257 = pneg %p135
      %p258 = pneg %p159
      %p259 = pneg %p156
      %p260 = pneg %p187
      %p261 = pneg %p184
      %s262 = smul.u32 %s22, %s21
      %s263 = smul.u32 2, %s262
      %p264 = scmp.lt.s32.totalorder %s263, 3
      %s265 = scalar_select %p264, %s263, 3
      %s266 = smul.addr %s265, 8
      %s267 = scalar_lea.vmem %s6, %s266
      %s268 = ssub.s32 1, %s21
      %s269 = smul.u32 %s22, %s268
      %s270 = smul.u32 2, %s269
      %p271 = scmp.lt.s32.totalorder %s270, 3
      %s272 = scalar_select %p271, %s270, 3
      %s273 = smul.addr %s272, 8
      %s274 = scalar_lea.vmem %s0, %s273
      %s275 = ssub.s32 1, %s21
      %s276 = smul.u32 %s22, %s275
      %s277 = smul.u32 2, %s276
      %s278 = smul.u32 %s22, %s21
      %s279 = smul.u32 2, %s278
      %p280 = scmp.lt.s32.totalorder %s279, 3
      %s281 = scalar_select %p280, %s279, 3
      %s282 = smul.addr %s281, 8
      %s283 = scalar_lea.vmem %s6, %s282
      %s284 = smul.u32 %s22, %s21
      %s285 = smul.u32 2, %s284
      %p287 = scmp.eq.s32.totalorder %s21, 0
      // Predicated region
      $region45: #{tpu_custom_call.1} parent=43 // pred_check
        %p288 = pneg %p287
      $region46: #{tpu_custom_call.1} parent=43 // pred_check_branch
        %290 = sbr.rel (%p288) target = $region48
      $region47: #{tpu_custom_call.1} parent=43 // pred_region
        %v291 = vld [vmem:[%s274] sm:$0xff]
        %v292 = vld [vmem:[%s274 + $0x8] sm:$0xff]
        %v293 = vpack.c.bf16 %v292, %v291
        %v294 = vld [vmem:[%s1] sm:$0xf]
        %v295 = vld [vmem:[%s1 + $0x4] sm:$0xf]
        %v296 = vld [vmem:[%s1 + $0x8] sm:$0xf]
        %v297 = vld [vmem:[%s1 + $0xc] sm:$0xf]
        %v302 = vunpack.c.l.b16 %v294
        %v303 = vunpack.c.l.b16 %v295
        %v304 = vunpack.c.l.b16 %v296
        %v305 = vunpack.c.l.b16 %v297
        %v306 = vpack.c.b16 %v303, %v302
        %v307 = vpack.c.b16 %v305, %v304
        %vm310 = vcmask 261120
        %v312 = vsel %vm310, %v293, 0
        %314 = vmatprep.subr.bf16.mxu0 0
        %315 = vmatpush1.bf16.msra.mxu0 %v306
        %316 = vmatprep.subr.bf16.mxu0 0
        %317 = vmatpush1.bf16.msra.mxu0 %v307
        %318 = vmatprep.subr.bf16.mxu0 0
        %319 = vmatpush1.bf16.msra.mxu0 0
        %320 = vmatprep.subr.bf16.mxu0 0
        %321 = vmatpush1.bf16.msra.mxu0 0
        %322 = vmatprep.subr.bf16.mxu0 0
        %323 = vmatpush1.bf16.msra.mxu0 0
        %324 = vmatprep.subr.bf16.mxu0 0
        %325 = vmatpush1.bf16.msra.mxu0 0
        %326 = vmatprep.subr.bf16.mxu0 0
        %327 = vmatpush1.bf16.msra.mxu0 0
        %328 = vmatprep.subr.bf16.mxu0 0
        %329 = vmatpush1.bf16.msra.mxu0 0
        %330 = vmatprep.subr.bf16.mxu0 0
        %331 = vmatpush1.bf16.msra.mxu0 0
        %332 = vmatprep.subr.bf16.mxu0 0
        %333 = vmatpush1.bf16.msra.mxu0 0
        %334 = vmatprep.subr.bf16.mxu0 0
        %335 = vmatpush1.bf16.msra.mxu0 0
        %336 = vmatprep.subr.bf16.mxu0 0
        %337 = vmatpush1.bf16.msra.mxu0 0
        %338 = vmatprep.subr.bf16.mxu0 0
        %339 = vmatpush1.bf16.msra.mxu0 0
        %340 = vmatprep.subr.bf16.mxu0 0
        %341 = vmatpush1.bf16.msra.mxu0 0
        %342 = vmatprep.subr.bf16.mxu0 0
        %343 = vmatpush1.bf16.msra.mxu0 0
        %344 = vmatprep.subr.bf16.mxu0 0
        %345 = vmatpush1.bf16.msra.mxu0 0
        %346 = vmatprep.mubr.bf16.mxu0 0
        %347 = vmatmul.mubr.bf16.gmra.mrb[0].mxu0 %v312
        %v348 = vpop.f32.mrb[0].mxu0
        %v349 = vadd.f32 0.0, %v348
        %v350 = vpop.f32.mrb[0].mxu0
        %v351 = vpop.f32.mrb[0].mxu0
        %v352 = vadd.f32 0.0, %v351
        %v353 = vpop.f32.mrb[0].mxu0
        %354 = vdwg.mxu0
        %p355 = scmp.eq.s32.totalorder %s22, 0
        // Predicated region
        $region49: #{tpu_custom_call.1} parent=47 // pred_check
          %p356 = pneg %p355
        $region50: #{tpu_custom_call.1} parent=47 // pred_check_branch
          %358 = sbr.rel (%p356) target = $region52
        $region51: #{tpu_custom_call.1} parent=47 // pred_region
          %359 = vst [vmem:[#allocation2] sm:$0x1] 0.0
          %360 = vst [vmem:[#allocation3] sm:$0x1] 0.0
        $region52: #{tpu_custom_call.1} parent=47 // pred_fallthru
          _
        %v361 = vld [vmem:[#allocation2] sm:$0x1]
        %v362 = vadd.f32 %v349, %v352
        %v363 = vrot.slane %v362, 4
        %v364 = vadd.f32 %v362, %v363
        %v365 = vrot.slane %v364, 2
        %v366 = vadd.f32 %v364, %v365
        %v367 = vrot.slane %v366, 1
        %v368 = vadd.f32 %v366, %v367
        %v369 = vadd.f32 %v361, %v368
        %370 = vst [vmem:[#allocation2] sm:$0x1] %v369
        %v371 = vld [vmem:[#allocation3] sm:$0x1]
        %v372 = vmul.f32 %v349, %v349
        %v373 = vmul.f32 %v352, %v352
        %v374 = vadd.f32 %v372, %v373
        %v375 = vrot.slane %v374, 4
        %v376 = vadd.f32 %v374, %v375
        %v377 = vrot.slane %v376, 2
        %v378 = vadd.f32 %v376, %v377
        %v379 = vrot.slane %v378, 1
        %v380 = vadd.f32 %v378, %v379
        %v381 = vadd.f32 %v371, %v380
        %382 = vst [vmem:[#allocation3] sm:$0x1] %v381
        %s383 = smul.u32 %s22, 16
        %s384 = scalar_lea.vmem [#allocation4], %s383
        %385 = vst [vmem:[%s384] sm:$0xff] %v349
        %386 = vst [vmem:[%s384 + $0x8] sm:$0xff] %v352
      $region48: #{tpu_custom_call.1} parent=43 // pred_fallthru
        _
      %p387 = scmp.eq.s32.totalorder %s21, 1
      // Predicated region
      $region53: #{tpu_custom_call.1} parent=43 // pred_check
        %p388 = pneg %p387
      $region54: #{tpu_custom_call.1} parent=43 // pred_check_branch
        %390 = sbr.rel (%p388) target = $region56
      $region55: #{tpu_custom_call.1} parent=43 // pred_region
        %p391 = scmp.eq.s32.totalorder %s22, 0
        // Predicated region
        $region57: #{tpu_custom_call.1} parent=55 // pred_check
          %p392 = pneg %p391
        $region58: #{tpu_custom_call.1} parent=55 // pred_check_branch
          %394 = sbr.rel (%p392) target = $region60
        $region59: #{tpu_custom_call.1} parent=55 // pred_region
          %v395 = vld [vmem:[#allocation2] sm:$0x1]
          %v396 = vmul.f32 %v395, 0.03125
          %v397 = vld [vmem:[#allocation3] sm:$0x1]
          %v398 = vmul.f32 %v397, 0.03125
          %v399 = vmul.f32 %v396, %v396
          %v400 = vsub.f32 %v398, %v399
          %v401 = vmax.f32 %v400, 0.0
          %v402 = vld [vmem:[%s2] sm:$0x1]
          %v403 = vadd.f32 %v401, 1e-05
          %v404 = vrsqrt.pop %v403
          %v405 = vmul.f32 %v402, %v404
          %v406 = vld [vmem:[%s3] sm:$0x1]
          %v407 = vmul.f32 %v396, %v405
          %v408 = vsub.f32 %v406, %v407
          %409 = vst [vmem:[#allocation2] sm:$0x1] %v405
          %410 = vst [vmem:[#allocation3] sm:$0x1] %v408
        $region60: #{tpu_custom_call.1} parent=55 // pred_fallthru
          _
        %s411 = smul.u32 %s22, 16
        %s412 = scalar_lea.vmem [#allocation4], %s411
        %v413 = vld [vmem:[%s412] sm:$0xff]
        %v414 = vld [vmem:[%s412 + $0x8] sm:$0xff]
        %v415 = vld [vmem:[#allocation2] sm:$0x1]
        %v417 = vlaneseq
        %v418 = vshrl.u32 %v417, 7
        %v419 = vsub.s32 0, %v418
        %v420 = vrot.slane %v415, %v419
        %v422 = vmul.f32 %v413, %v420
        %v423 = vmul.f32 %v414, %v420
        %v424 = vld [vmem:[#allocation3] sm:$0x1]
        %v426 = vlaneseq
        %v427 = vshrl.u32 %v426, 7
        %v428 = vsub.s32 0, %v427
        %v429 = vrot.slane %v424, %v428
        %v431 = vadd.f32 %v422, %v429
        %v432 = vadd.f32 %v423, %v429
        %v433 = vmax.f32 %v431, 0.0
        %v434 = vmax.f32 %v432, 0.0
        %v435 = vld [vmem:[%s4] sm:$0xff]
        %v436 = vld [vmem:[%s4 + $0x8] sm:$0xff]
        %v437 = vld [vmem:[%s4 + $0x10] sm:$0xff]
        %v438 = vld [vmem:[%s4 + $0x18] sm:$0xff]
        %v439 = vld [vmem:[%s4 + $0x20] sm:$0xff]
        %v440 = vld [vmem:[%s4 + $0x28] sm:$0xff]
        %v441 = vld [vmem:[%s4 + $0x30] sm:$0xff]
        %v442 = vld [vmem:[%s4 + $0x38] sm:$0xff]
        %v443 = vld [vmem:[%s4 + $0x40] sm:$0xff]
        %v444 = vld [vmem:[%s4 + $0x48] sm:$0xff]
        %v445 = vld [vmem:[%s4 + $0x50] sm:$0xff]
        %v446 = vld [vmem:[%s4 + $0x58] sm:$0xff]
        %v447 = vld [vmem:[%s4 + $0x60] sm:$0xff]
        %v448 = vld [vmem:[%s4 + $0x68] sm:$0xff]
        %v449 = vld [vmem:[%s4 + $0x70] sm:$0xff]
        %v450 = vld [vmem:[%s4 + $0x78] sm:$0xff]
        %v451 = vld [vmem:[%s5] sm:$0x1]
        %v453 = vlaneseq
        %v454 = vshrl.u32 %v453, 7
        %v455 = vsub.s32 0, %v454
        %v456 = vrot.slane %v451, %v455
        %458 = vmatprep.subr.mxu0 0.0
        %459 = vmatpush1.msra.mxu0 %v435
        %460 = vmatprep.subr.mxu0 0.0
        %461 = vmatpush1.msra.mxu0 %v436
        %462 = vmatprep.subr.mxu0 0.0
        %463 = vmatpush1.msra.mxu0 %v437
        %464 = vmatprep.subr.mxu0 0.0
        %465 = vmatpush1.msra.mxu0 %v438
        %466 = vmatprep.subr.mxu0 0.0
        %467 = vmatpush1.msra.mxu0 %v439
        %468 = vmatprep.subr.mxu0 0.0
        %469 = vmatpush1.msra.mxu0 %v440
        %470 = vmatprep.subr.mxu0 0.0
        %471 = vmatpush1.msra.mxu0 %v441
        %472 = vmatprep.subr.mxu0 0.0
        %473 = vmatpush1.msra.mxu0 %v442
        %474 = vmatprep.subr.mxu0 0.0
        %475 = vmatpush1.msra.mxu0 %v443
        %476 = vmatprep.subr.mxu0 0.0
        %477 = vmatpush1.msra.mxu0 %v444
        %478 = vmatprep.subr.mxu0 0.0
        %479 = vmatpush1.msra.mxu0 %v445
        %480 = vmatprep.subr.mxu0 0.0
        %481 = vmatpush1.msra.mxu0 %v446
        %482 = vmatprep.subr.mxu0 0.0
        %483 = vmatpush1.msra.mxu0 %v447
        %484 = vmatprep.subr.mxu0 0.0
        %485 = vmatpush1.msra.mxu0 %v448
        %486 = vmatprep.subr.mxu0 0.0
        %487 = vmatpush1.msra.mxu0 %v449
        %488 = vmatprep.subr.mxu0 0.0
        %489 = vmatpush1.msra.mxu0 %v450
        %490 = vmatprep.subr.mxu0 0.0
        %491 = vmatpush1.msra.mxu0 0.0
        %492 = vmatprep.subr.mxu0 0.0
        %493 = vmatpush1.msra.mxu0 0.0
        %494 = vmatprep.subr.mxu0 0.0
        %495 = vmatpush1.msra.mxu0 0.0
        %496 = vmatprep.subr.mxu0 0.0
        %497 = vmatpush1.msra.mxu0 0.0
        %498 = vmatprep.subr.mxu0 0.0
        %499 = vmatpush1.msra.mxu0 0.0
        %500 = vmatprep.subr.mxu0 0.0
        %501 = vmatpush1.msra.mxu0 0.0
        %502 = vmatprep.subr.mxu0 0.0
        %503 = vmatpush1.msra.mxu0 0.0
        %504 = vmatprep.subr.mxu0 0.0
        %505 = vmatpush1.msra.mxu0 0.0
        %506 = vmatprep.subr.mxu0 0.0
        %507 = vmatpush1.msra.mxu0 0.0
        %508 = vmatprep.subr.mxu0 0.0
        %509 = vmatpush1.msra.mxu0 0.0
        %510 = vmatprep.subr.mxu0 0.0
        %511 = vmatpush1.msra.mxu0 0.0
        %512 = vmatprep.subr.mxu0 0.0
        %513 = vmatpush1.msra.mxu0 0.0
        %514 = vmatprep.subr.mxu0 0.0
        %515 = vmatpush1.msra.mxu0 0.0
        %516 = vmatprep.subr.mxu0 0.0
        %517 = vmatpush1.msra.mxu0 0.0
        %518 = vmatprep.subr.mxu0 0.0
        %519 = vmatpush1.msra.mxu0 0.0
        %520 = vmatprep.subr.mxu0 0.0
        %521 = vmatpush1.msra.mxu0 0.0
        %522 = vmatprep.mubr.f32.mxu0 0.0
        %523 = vmatmul.mubr.f32.gmra.mrb[0].mxu0 %v433
        %v524 = vpop.f32.mrb[0].mxu0
        %v525 = vadd.f32 %v456, %v524
        %v526 = vpop.f32.mrb[0].mxu0
        %527 = vmatprep.mubr.f32.mxu0 0.0
        %528 = vmatmul.mubr.f32.gmra.mrb[0].mxu0 %v434
        %v529 = vpop.f32.mrb[0].mxu0
        %v530 = vadd.f32 %v456, %v529
        %v531 = vpop.f32.mrb[0].mxu0
        %532 = vdwg.mxu0
        %vm533 = vcmask 31744
        %v534 = vsel %vm533, %v525, -inf
        %535 = vmax.xlane.f32.xlu0 %v534
        %v536 = vpop.xlane.xlu0 %535
        %v537 = vsel %vm533, %v530, -inf
        %538 = vmax.xlane.f32.xlu0 %v537
        %v539 = vpop.xlane.xlu0 %538
        %v540 = vsub.f32 %v525, %v536
        %v541 = vsub.f32 %v530, %v539
        %v542 = vmul.f32 %v540, 1.442695
        %v543 = vpow.pop %v542
        %v544 = vmul.f32 %v541, 1.442695
        %v545 = vpow.pop %v544
        %v546 = vsel %vm533, %v543, 0.0
        %547 = vadd.xlane.f32.xlu0 %v546
        %v548 = vpop.xlane.xlu0 %547
        %v549 = vsel %vm533, %v545, 0.0
        %550 = vadd.xlane.f32.xlu0 %v549
        %v551 = vpop.xlane.xlu0 %550
        %v552 = vlog2.pop %v548
        %v553 = vmul.f32 %v552, 0.6931472
        %v554 = vlog2.pop %v551
        %v555 = vmul.f32 %v554, 0.6931472
        %v556 = vsub.f32 %v540, %v553
        %v557 = vsub.f32 %v541, %v555
        %558 = vst.msk [vmem:[%s283] sm:$0xff] %vm533, %v556
        %559 = vst.msk [vmem:[%s283 + $0x8] sm:$0xff] %vm533, %v557
      $region56: #{tpu_custom_call.1} parent=43 // pred_fallthru
        _
      %s560 = smul.u32 %s22, %s21
      %s561 = smul.u32 2, %s560
      %p562 = scmp.lt.s32.totalorder %s561, 3
      %s563 = scalar_select %p562, %s561, 3
      %s564 = smul.addr %s563, 8
      %s565 = scalar_lea.vmem %s6, %s564
      // Predicated region
      $region61: #{tpu_custom_call.1} parent=43 // pred_check
        %p566 = pneg %p184
      $region62: #{tpu_custom_call.1} parent=43 // pred_check_branch
        %568 = sbr.rel (%p566) target = $region64
      $region63: #{tpu_custom_call.1} parent=43 // pred_region
        %s569 = smul.u32 %s22, %s21
        %s570 = smul.u32 2, %s569
      $region64: #{tpu_custom_call.1} parent=43 // pred_fallthru
        _
    $region44: #{tpu_custom_call.1} parent=5 // pred_fallthru
      _
    %p571 = scmp.le.s32.totalorder 2, %s12
    // Predicated region
    $region65: #{tpu_custom_call.1} parent=5 // pred_check
      %p572 = pneg %p571
    $region66: #{tpu_custom_call.1} parent=5 // pred_check_branch
      %574 = sbr.rel (%p572) target = $region68
    $region67: #{tpu_custom_call.1} parent=5 // pred_region
      %s575 = ssub.s32 %s12, 2
      // Predicated region
      $region69: #{tpu_custom_call.1} parent=67 // pred_check
        %p576 = pneg %p190
      $region70: #{tpu_custom_call.1} parent=67 // pred_check_branch
        %578 = sbr.rel (%p576) target = $region72
      $region71: #{tpu_custom_call.1} parent=67 // pred_region
        %s579 = smul.u32 %s24, %s23
        %s580 = smul.u32 2, %s579
        %p581 = scmp.lt.s32.totalorder %s580, 3
        %s582 = scalar_select %p581, %s580, 3
        %s583 = smul.addr %s582, 8
        %s584 = scalar_lea.vmem %s6, %s583
      $region72: #{tpu_custom_call.1} parent=67 // pred_fallthru
        _
    $region68: #{tpu_custom_call.1} parent=5 // pred_fallthru
      _
  $region6: #{tpu_custom_call.1} parent=0 // loop_footer
    %s16 = sadd.s32 1, %s12
  $region7: #{tpu_custom_call.1} parent=0 // loop_footer_branch
    %11 = sbr.rel target = $region3
  $region8: #{tpu_custom_call.1} parent=0 // loop_exit
    _

</llo_original>
